<compile_context>
chip_gen: v7x
topology: tpu7x:2x2x1
jax: 0.10.0
libtpu: 0.0.40
codegen_flags: <defaults>
</compile_context>

<pallas_src>
import functools

import jax
import jax.numpy as jnp
from jax import lax
from jax.experimental import pallas as pl
from jax.experimental.pallas import tpu as pltpu


def _round_up(x, m):
    return (x + m - 1) // m * m


def _cdiv(a, b):
    return (a + b - 1) // b


def _gelu(h, approximate):
    if approximate:
        # tanh-approx GELU rides the otherwise-idle EUP slot.
        c = 0.7978845608028654  # sqrt(2/pi)
        return 0.5 * h * (1.0 + jnp.tanh(c * (h + 0.044715 * h * h * h)))
    # exact erf GELU -- PyTorch nn.GELU() default numerics.
    return 0.5 * h * (1.0 + lax.erf(h * 0.7071067811865476))


# ----------------------------- kernels --------------------------------------

def ffn_kernel_resident(x_ref, w1_ref, b1_ref, w2_ref, b2_ref, o_ref,
                        *, approximate_gelu):
    # Whole hidden dim resident in VMEM: one pass, no accumulator round-trip.
    h = jnp.dot(x_ref[...], w1_ref[...], preferred_element_type=jnp.float32)
    h = h + b1_ref[...].astype(jnp.float32)
    h = _gelu(h, approximate_gelu)
    # Dropout(p=0.0) is the identity -> nothing to do.
    out = jnp.dot(h.astype(w2_ref.dtype), w2_ref[...],
                  preferred_element_type=jnp.float32)
    o_ref[...] = (out + b2_ref[...].astype(jnp.float32)).astype(o_ref.dtype)


def ffn_kernel_streamed(x_ref, w1_ref, b1_ref, w2_ref, b2_ref, o_ref, acc_ref,
                        *, approximate_gelu):
    # Hidden dim streamed as a reduction axis; f32 accumulator in VMEM.
    h_idx = pl.program_id(1)

    @pl.when(h_idx == 0)
    def _():
        acc_ref[...] = jnp.zeros_like(acc_ref)

    h = jnp.dot(x_ref[...], w1_ref[...], preferred_element_type=jnp.float32)
    h = h + b1_ref[...].astype(jnp.float32)
    h = _gelu(h, approximate_gelu)
    # Dropout(p=0.0) is the identity -> nothing to do.
    acc_ref[...] += jnp.dot(h.astype(w2_ref.dtype), w2_ref[...],
                            preferred_element_type=jnp.float32)

    @pl.when(h_idx == pl.num_programs(1) - 1)
    def _():
        o_ref[...] = (acc_ref[...]
                      + b2_ref[...].astype(jnp.float32)).astype(o_ref.dtype)


# ----------------------------- wrapper ---------------------------------------

def _vmem_capacity_bytes():
    try:
        return int(pltpu.get_tpu_info().vmem_capacity_bytes)
    except Exception:
        return 64 << 20  # conservative fallback (valid on every generation)


def feed_forward(x, w1, b1, w2, b2, *, tm=None, th=None,
                 approximate_gelu=False, compute_dtype=None):
    """x: (B, S, D); w1: (D, H); b1: (H,); w2: (H, D); b2: (D,)."""
    B, S, D = x.shape
    H = w1.shape[1]
    rows = B * S
    out_dtype = x.dtype
    auto_tm = tm is None

    # Optional bf16 MXU path (halves weight/activation HBM traffic, 3-4x MXU
    # rate on v6e/v7x); accumulation stays f32 inside the kernel.
    if compute_dtype is not None:
        x = x.astype(compute_dtype)
        w1 = w1.astype(compute_dtype)
        b1 = b1.astype(compute_dtype)
        w2 = w2.astype(compute_dtype)
        b2 = b2.astype(compute_dtype)

    in_item = jnp.dtype(x.dtype).itemsize
    w_item = jnp.dtype(w1.dtype).itemsize
    out_item = jnp.dtype(out_dtype).itemsize

    xf = x.reshape(rows, D)
    rows_p = _round_up(rows, 8)
    if rows_p != rows:
        # Tiny (<8 rows) pad only when B*S isn't a sublane multiple; no
        # pad-to-tm round trip (grid is ragged via cdiv).
        xf = jnp.pad(xf, ((0, rows_p - rows), (0, 0)))

    cap = _vmem_capacity_bytes()
    budget = int(cap * 0.72)  # ~46 MiB on v7x, ~92 MiB on v5e/v6e

    def max_tm_for(th_, n_h_):
        # Double-buffered x/out/weight tiles + biases + f32 hidden intermediate
        # (+ accumulator when streaming).
        fixed = 2 * (D * th_ + th_ * D) * w_item + 2 * (th_ + D) * w_item
        per_row = (2 * D * in_item + 2 * D * out_item + 4 * th_
                   + (4 * D if n_h_ > 1 else 0))
        avail = budget - fixed
        return avail // per_row if avail > 0 else 0

    # ---- hidden tile: prefer whole-H residency, else 256-multiples ----------
    H_w = H
    if th is None:
        if max_tm_for(H, 1) >= min(rows_p, 128):
            th = H                                   # weights stay VMEM-resident
        else:
            H_w = H if H % 128 == 0 else _round_up(H, 128)
            for cand in (1024, 512, 256, 128):       # 256-multiples preferred
                if H_w % cand == 0 and max_tm_for(cand, H_w // cand) >= min(rows_p, 256):
                    th = cand
                    break
            else:
                th = 128
    else:
        if H % th != 0:
            H_w = _round_up(H, th)
    n_h = H_w // th
    resident = (n_h == 1)

    # Pad hidden dim if needed (exact: padded units see zero weights/bias and
    # contribute zero to the second matmul).
    if H_w != H:
        w1 = jnp.pad(w1, ((0, 0), (0, H_w - H)))
        b1 = jnp.pad(b1, ((0, H_w - H),))
        w2 = jnp.pad(w2, ((0, H_w - H), (0, 0)))

    # ---- row tile: target 512, shrink to fit the VMEM budget ----------------
    if auto_tm:
        tm_cap = max_tm_for(th, n_h)
        tm = min(512, rows_p, max(8, (tm_cap // 8) * 8))
    tm = max(8, min(_round_up(tm, 8), rows_p))
    n_rows = _cdiv(rows_p, tm)
    # v7x-class chips (<=64 MiB VMEM, 2 TensorCores): keep the parallel row
    # axis evenly splittable across cores.
    if auto_tm and cap <= (64 << 20) and n_rows > 1 and n_rows % 2 == 1:
        tm_even = _round_up(_cdiv(rows_p, n_rows + 1), 8)
        if tm_even >= 8 and _cdiv(rows_p, tm_even) % 2 == 0:
            tm = tm_even
            n_rows = _cdiv(rows_p, tm)

    b1r = b1.reshape(1, H_w)
    b2r = b2.reshape(1, D)

    footprint = (2 * tm * D * in_item
                 + 2 * (D * th + th * D) * w_item
                 + 2 * (th + D) * w_item
                 + 2 * tm * D * out_item
                 + tm * th * 4
                 + (0 if resident else tm * D * 4))
    vmem_limit = int(min(max(footprint + footprint // 4 + (2 << 20), 32 << 20),
                         int(cap * 0.9)))

    weight_bytes = (D * H_w + H_w * D) * w_item * (1 if resident else n_rows)
    cost = pl.CostEstimate(
        flops=2 * 2 * rows_p * D * H_w,
        transcendentals=rows_p * H_w,
        bytes_accessed=int(rows_p * D * (in_item + out_item)
                           + weight_bytes + (H_w + D) * w_item),
    )

    if resident:
        kernel = functools.partial(ffn_kernel_resident,
                                   approximate_gelu=approximate_gelu)
        out = pl.pallas_call(
            kernel,
            out_shape=jax.ShapeDtypeStruct((rows_p, D), out_dtype),
            grid_spec=pltpu.PrefetchScalarGridSpec(
                num_scalar_prefetch=0,
                grid=(n_rows,),
                in_specs=[
                    pl.BlockSpec((tm, D), lambda i: (i, 0)),    # x tile
                    pl.BlockSpec((D, H_w), lambda i: (0, 0)),   # W1 (resident)
                    pl.BlockSpec((1, H_w), lambda i: (0, 0)),   # b1
                    pl.BlockSpec((H_w, D), lambda i: (0, 0)),   # W2 (resident)
                    pl.BlockSpec((1, D), lambda i: (0, 0)),     # b2
                ],
                out_specs=pl.BlockSpec((tm, D), lambda i: (i, 0)),
            ),
            compiler_params=pltpu.CompilerParams(
                dimension_semantics=("parallel",),
                vmem_limit_bytes=vmem_limit,
            ),
            cost_estimate=cost,
        )(xf, w1, b1r, w2, b2r)
    else:
        kernel = functools.partial(ffn_kernel_streamed,
                                   approximate_gelu=approximate_gelu)
        out = pl.pallas_call(
            kernel,
            out_shape=jax.ShapeDtypeStruct((rows_p, D), out_dtype),
            grid_spec=pltpu.PrefetchScalarGridSpec(
                num_scalar_prefetch=0,
                grid=(n_rows, n_h),                            # rows outer, H inner
                in_specs=[
                    pl.BlockSpec((tm, D), lambda i, h: (i, 0)),   # x tile
                    pl.BlockSpec((D, th), lambda i, h: (0, h)),   # W1 tile (streamed)
                    pl.BlockSpec((1, th), lambda i, h: (0, h)),   # b1 tile
                    pl.BlockSpec((th, D), lambda i, h: (h, 0)),   # W2 tile (streamed)
                    pl.BlockSpec((1, D), lambda i, h: (0, 0)),    # b2
                ],
                out_specs=pl.BlockSpec((tm, D), lambda i, h: (i, 0)),
                scratch_shapes=[pltpu.VMEM((tm, D), jnp.float32)],
            ),
            compiler_params=pltpu.CompilerParams(
                dimension_semantics=("parallel", "arbitrary"),
                vmem_limit_bytes=vmem_limit,
            ),
            cost_estimate=cost,
        )(xf, w1, b1r, w2, b2r)

    if rows_p != rows:
        out = out[:rows]
    return out.reshape(B, S, D)


# ----------------------------- reference / params ----------------------------

def init_params(key, dim, mult=4, dtype=jnp.float32):
    # PyTorch nn.Linear default init: U(-1/sqrt(fan_in), 1/sqrt(fan_in)).
    hidden = dim * mult
    k1, k2, k3, k4 = jax.random.split(key, 4)
    bound1 = 1.0 / (dim ** 0.5)
    bound2 = 1.0 / (hidden ** 0.5)
    # stored as (in_features, out_features) so the kernel does x @ W
    w1 = jax.random.uniform(k1, (dim, hidden), dtype, -bound1, bound1)
    b1 = jax.random.uniform(k2, (hidden,), dtype, -bound1, bound1)
    w2 = jax.random.uniform(k3, (hidden, dim), dtype, -bound2, bound2)
    b2 = jax.random.uniform(k4, (dim,), dtype, -bound2, bound2)
    return w1, b1, w2, b2


def _reference(x, w1, b1, w2, b2):
    h = x @ w1 + b1
    h = 0.5 * h * (1.0 + lax.erf(h * 0.7071067811865476))
    return h @ w2 + b2


if __name__ == "__main__":
    key = jax.random.PRNGKey(0)

    # Test 1: small spec-consistent shapes (batch=2, seq=8, dim=32, mult=4);
    # takes the weight-resident single-pass path.
    kx, kp, key = jax.random.split(key, 3)
    batch, seq, dim, mult = 2, 8, 32, 4            # hidden = 128
    x = jax.random.normal(kx, (batch, seq, dim), jnp.float32)
    w1, b1, w2, b2 = init_params(kp, dim, mult)
    out = jax.block_until_ready(feed_forward(x, w1, b1, w2, b2))
    ref = _reference(x, w1, b1, w2, b2)
    assert out.shape == (batch, seq, dim)
    assert jnp.allclose(out, ref, atol=1e-5, rtol=1e-5)

    # Test 2: exercises the tiny sublane row pad (rows=18) with dim=128,
    # mult=8 -> H=1024 (still weight-resident on-device).
    kx2, kp2, key = jax.random.split(key, 3)
    batch2, seq2, dim2, mult2 = 2, 9, 128, 8
    x2 = jax.random.normal(kx2, (batch2, seq2, dim2), jnp.float32)
    w1b, b1b, w2b, b2b = init_params(kp2, dim2, mult2)
    out2 = jax.block_until_ready(feed_forward(x2, w1b, b1b, w2b, b2b))
    ref2 = _reference(x2, w1b, b1b, w2b, b2b)
    assert out2.shape == (batch2, seq2, dim2)
    assert jnp.allclose(out2, ref2, atol=1e-4, rtol=1e-4)

    # Test 3: force the streamed-hidden / accumulator path (th=256 -> 4
    # reduction steps, ragged row grid) to validate that code path too.
    out3 = jax.block_until_ready(
        feed_forward(x2, w1b, b1b, w2b, b2b, tm=8, th=256))
    assert out3.shape == (batch2, seq2, dim2)
    assert jnp.allclose(out3, ref2, atol=1e-4, rtol=1e-4)

    # Test 4: bf16 MXU path (f32 accumulation), loose tolerance vs f32 ref.
    out4 = jax.block_until_ready(
        feed_forward(x, w1, b1, w2, b2, compute_dtype=jnp.bfloat16))
    assert out4.shape == (batch, seq, dim)
    assert out4.dtype == x.dtype
    assert jnp.allclose(out4, ref, atol=5e-2, rtol=5e-2)

    print("KERNEL_OK")
</pallas_src>

<mosaic_0001>
module attributes {stable_mosaic.version = 11 : i64} {
  func.func @ffn_kernel_resident(%arg0: i32, %arg1: memref<16x32xf32, #tpu.memory_space<vmem>>, %arg2: memref<32x128xf32, #tpu.memory_space<vmem>>, %arg3: memref<1x128xf32, #tpu.memory_space<vmem>>, %arg4: memref<128x32xf32, #tpu.memory_space<vmem>>, %arg5: memref<1x32xf32, #tpu.memory_space<vmem>>, %arg6: memref<16x32xf32, #tpu.memory_space<vmem>>) attributes {dimension_semantics = [#tpu.dimension_semantics<parallel>], iteration_bounds = array<i64: 1>, scalar_prefetch = 0 : i64, scratch_operands = 0 : i64, tpu.core_type = #tpu.core_type<tc>, window_params = [{transform_indices = @transform_0, window_bounds = array<i64: 16, 32>}, {pipeline_mode = #tpu.pipeline_mode<synchronous>, transform_indices = @transform_1, window_bounds = array<i64: 32, 128>}, {pipeline_mode = #tpu.pipeline_mode<synchronous>, transform_indices = @transform_2, window_bounds = array<i64: 1, 128>}, {pipeline_mode = #tpu.pipeline_mode<synchronous>, transform_indices = @transform_3, window_bounds = array<i64: 128, 32>}, {pipeline_mode = #tpu.pipeline_mode<synchronous>, transform_indices = @transform_4, window_bounds = array<i64: 1, 32>}, {transform_indices = @transform_5, window_bounds = array<i64: 16, 32>}]} {
    %c0 = arith.constant 0 : index
    %c0_0 = arith.constant 0 : index
    %0 = vector.load %arg1[%c0, %c0_0] : memref<16x32xf32, #tpu.memory_space<vmem>>, vector<16x32xf32>
    %c0_1 = arith.constant 0 : index
    %c0_2 = arith.constant 0 : index
    %1 = vector.load %arg2[%c0_1, %c0_2] : memref<32x128xf32, #tpu.memory_space<vmem>>, vector<32x128xf32>
    %cst = arith.constant dense<0.000000e+00> : vector<16x128xf32>
    %2 = tpu.matmul %0, %1, %cst {dimension_numbers = #tpu.dot_dimension_numbers<[1], [0], [0], [1], [0, 0, 1, 1], [], []>} : vector<16x32xf32>, vector<32x128xf32>, vector<16x128xf32> -> vector<16x128xf32>
    %c0_3 = arith.constant 0 : index
    %c0_4 = arith.constant 0 : index
    %3 = vector.load %arg3[%c0_3, %c0_4] : memref<1x128xf32, #tpu.memory_space<vmem>>, vector<1x128xf32>
    %4 = vector.broadcast %3 : vector<1x128xf32> to vector<16x128xf32>
    %5 = arith.addf %2, %4 : vector<16x128xf32>
    %cst_5 = arith.constant 5.000000e-01 : f32
    %6 = vector.broadcast %cst_5 : f32 to vector<16x128xf32>
    %7 = arith.mulf %6, %5 : vector<16x128xf32>
    %cst_6 = arith.constant 0.707106769 : f32
    %8 = vector.broadcast %cst_6 : f32 to vector<16x128xf32>
    %9 = arith.mulf %5, %8 : vector<16x128xf32>
    %10 = math.erf %9 : vector<16x128xf32>
    %cst_7 = arith.constant 1.000000e+00 : f32
    %11 = vector.broadcast %cst_7 : f32 to vector<16x128xf32>
    %12 = arith.addf %11, %10 : vector<16x128xf32>
    %13 = arith.mulf %7, %12 : vector<16x128xf32>
    %c0_8 = arith.constant 0 : index
    %c0_9 = arith.constant 0 : index
    %14 = vector.load %arg4[%c0_8, %c0_9] : memref<128x32xf32, #tpu.memory_space<vmem>>, vector<128x32xf32>
    %cst_10 = arith.constant dense<0.000000e+00> : vector<16x32xf32>
    %15 = tpu.matmul %13, %14, %cst_10 {dimension_numbers = #tpu.dot_dimension_numbers<[1], [0], [0], [1], [0, 0, 1, 1], [], []>} : vector<16x128xf32>, vector<128x32xf32>, vector<16x32xf32> -> vector<16x32xf32>
    %c0_11 = arith.constant 0 : index
    %c0_12 = arith.constant 0 : index
    %16 = vector.load %arg5[%c0_11, %c0_12] : memref<1x32xf32, #tpu.memory_space<vmem>>, vector<1x32xf32>
    %17 = vector.broadcast %16 : vector<1x32xf32> to vector<16x32xf32>
    %18 = arith.addf %15, %17 : vector<16x32xf32>
    %c0_13 = arith.constant 0 : index
    %c0_14 = arith.constant 0 : index
    %19 = vector.load %arg6[%c0_13, %c0_14] : memref<16x32xf32, #tpu.memory_space<vmem>>, vector<16x32xf32>
    tpu.vector_store %arg6[%c0_13, %c0_14], %18 {strides = array<i32>} : memref<16x32xf32, #tpu.memory_space<vmem>>, vector<16x32xf32>,
    return
  }
  func.func @transform_0(%arg0: i32) -> (i32, i32) {
    %c0_i32 = arith.constant 0 : i32
    %c0_i32_0 = arith.constant 0 : i32
    return %arg0, %c0_i32 : i32, i32
  }
  func.func @transform_1(%arg0: i32) -> (i32, i32) {
    %c0_i32 = arith.constant 0 : i32
    %c0_i32_0 = arith.constant 0 : i32
    %c0_i32_1 = arith.constant 0 : i32
    return %c0_i32, %c0_i32_0 : i32, i32
  }
  func.func @transform_2(%arg0: i32) -> (i32, i32) {
    %c0_i32 = arith.constant 0 : i32
    %c0_i32_0 = arith.constant 0 : i32
    %c0_i32_1 = arith.constant 0 : i32
    return %c0_i32, %c0_i32_0 : i32, i32
  }
  func.func @transform_3(%arg0: i32) -> (i32, i32) {
    %c0_i32 = arith.constant 0 : i32
    %c0_i32_0 = arith.constant 0 : i32
    %c0_i32_1 = arith.constant 0 : i32
    return %c0_i32, %c0_i32_0 : i32, i32
  }
  func.func @transform_4(%arg0: i32) -> (i32, i32) {
    %c0_i32 = arith.constant 0 : i32
    %c0_i32_0 = arith.constant 0 : i32
    %c0_i32_1 = arith.constant 0 : i32
    return %c0_i32, %c0_i32_0 : i32, i32
  }
  func.func @transform_5(%arg0: i32) -> (i32, i32) {
    %c0_i32 = arith.constant 0 : i32
    %c0_i32_0 = arith.constant 0 : i32
    return %arg0, %c0_i32 : i32, i32
  }
}

</mosaic_0001>

<llo_original>
// kernel: tpu_custom_call.1
$region0: #{tpu_custom_call.1}
  #allocation0 [shape = 'u32[]', space=smem, size = 0x4, offset = 0x4, fixed_abs, tag = 'smem constant byte address 0x4 - core index']
  #allocation1 [shape = 'u32[144,128]{1,0:T(1,128)}', space=vmem, size = 0x12000, scoped, tag = 'internal scratch']
  %s0 = inlined_call_operand.vmem [shape: f32[16,32], index: 0, kind: input, shape index: {}]
  %s1 = inlined_call_operand.vmem [shape: f32[32,128], index: 1, kind: input, shape index: {}]
  %s2 = inlined_call_operand.vmem [shape: f32[1,128], index: 2, kind: input, shape index: {}]
  %s3 = inlined_call_operand.vmem [shape: f32[128,32], index: 3, kind: input, shape index: {}]
  %s4 = inlined_call_operand.vmem [shape: f32[1,32], index: 4, kind: input, shape index: {}]
  %s5 = inlined_call_operand.hbm [shape: f32[16,32], index: 5, kind: output, shape index: {}]
  %s6 = sld [smem:[#allocation0]]
  $region30: #{tpu_custom_call.1} parent=0
    _
  %s8 = ssub.s32 1, %s6
  %s9 = scalar_select 0, %s8, %s6
  $region1: #{tpu_custom_call.1} parent=0
    #allocation2 [shape = 'u8[8192]{0}', space=vmem, size = 0x2000, scoped, tag = 'output window, operand 0, single buffered']
    #allocation3 [shape = 's32[1]{0}', space=sflag, size = 0x4, scoped, tag = 'scoped memory for tpu_custom_call.1']
    %10 = vsyncpa [#allocation3], 0
    // Predicated region
    $region2: #{tpu_custom_call.1} parent=1 // pred_check
      _
    $region3: #{tpu_custom_call.1} parent=1 // pred_check_branch
      %12 = sbr.rel (0) target = $region5
    $region4: #{tpu_custom_call.1} parent=1 // pred_region
      _
    $region5: #{tpu_custom_call.1} parent=1 // pred_fallthru
      _
    // Predicated region
    $region6: #{tpu_custom_call.1} parent=1 // pred_check
      _
    $region7: #{tpu_custom_call.1} parent=1 // pred_check_branch
      %14 = sbr.rel (0) target = $region9
    $region8: #{tpu_custom_call.1} parent=1 // pred_region
      _
    $region9: #{tpu_custom_call.1} parent=1 // pred_fallthru
      _
    // Predicated region
    $region10: #{tpu_custom_call.1} parent=1 // pred_check
      _
    $region11: #{tpu_custom_call.1} parent=1 // pred_check_branch
      %16 = sbr.rel (0) target = $region13
    $region12: #{tpu_custom_call.1} parent=1 // pred_region
      _
    $region13: #{tpu_custom_call.1} parent=1 // pred_fallthru
      _
    // Predicated region
    $region14: #{tpu_custom_call.1} parent=1 // pred_check
      _
    $region15: #{tpu_custom_call.1} parent=1 // pred_check_branch
      %18 = sbr.rel (0) target = $region17
    $region16: #{tpu_custom_call.1} parent=1 // pred_region
      _
    $region17: #{tpu_custom_call.1} parent=1 // pred_fallthru
      _
    // Predicated region
    $region18: #{tpu_custom_call.1} parent=1 // pred_check
      _
    $region19: #{tpu_custom_call.1} parent=1 // pred_check_branch
      %20 = sbr.rel (0) target = $region21
    $region20: #{tpu_custom_call.1} parent=1 // pred_region
      _
    $region21: #{tpu_custom_call.1} parent=1 // pred_fallthru
      _
    %v21 = vld [vmem:[%s0] sm:$0xff]
    %v22 = vld [vmem:[%s0 + $0x8] sm:$0xff]
    %v23 = vld [vmem:[%s1] sm:$0xff]
    %v24 = vld [vmem:[%s1 + $0x8] sm:$0xff]
    %v25 = vld [vmem:[%s1 + $0x10] sm:$0xff]
    %v26 = vld [vmem:[%s1 + $0x18] sm:$0xff]
    %v27 = vld [vmem:[%s2] sm:$0x1]
    %v29 = vlaneseq
    %v30 = vshrl.u32 %v29, 7
    %v31 = vsub.s32 0, %v30
    %v32 = vrot.slane %v27, %v31
    %vm34 = vcmask 261120
    %v36 = vsel %vm34, %v21, 0
    %v39 = vsel %vm34, %v22, 0
    %41 = vmatprep.subr.mxu0 0.0
    %42 = vmatpush1.msra.mxu0 %v23
    %43 = vmatprep.subr.mxu0 0.0
    %44 = vmatpush1.msra.mxu0 %v24
    %45 = vmatprep.subr.mxu0 0.0
    %46 = vmatpush1.msra.mxu0 %v25
    %47 = vmatprep.subr.mxu0 0.0
    %48 = vmatpush1.msra.mxu0 %v26
    %49 = vmatprep.subr.mxu0 0.0
    %50 = vmatpush1.msra.mxu0 0.0
    %51 = vmatprep.subr.mxu0 0.0
    %52 = vmatpush1.msra.mxu0 0.0
    %53 = vmatprep.subr.mxu0 0.0
    %54 = vmatpush1.msra.mxu0 0.0
    %55 = vmatprep.subr.mxu0 0.0
    %56 = vmatpush1.msra.mxu0 0.0
    %57 = vmatprep.subr.mxu0 0.0
    %58 = vmatpush1.msra.mxu0 0.0
    %59 = vmatprep.subr.mxu0 0.0
    %60 = vmatpush1.msra.mxu0 0.0
    %61 = vmatprep.subr.mxu0 0.0
    %62 = vmatpush1.msra.mxu0 0.0
    %63 = vmatprep.subr.mxu0 0.0
    %64 = vmatpush1.msra.mxu0 0.0
    %65 = vmatprep.subr.mxu0 0.0
    %66 = vmatpush1.msra.mxu0 0.0
    %67 = vmatprep.subr.mxu0 0.0
    %68 = vmatpush1.msra.mxu0 0.0
    %69 = vmatprep.subr.mxu0 0.0
    %70 = vmatpush1.msra.mxu0 0.0
    %71 = vmatprep.subr.mxu0 0.0
    %72 = vmatpush1.msra.mxu0 0.0
    %73 = vmatprep.subr.mxu0 0.0
    %74 = vmatpush1.msra.mxu0 0.0
    %75 = vmatprep.subr.mxu0 0.0
    %76 = vmatpush1.msra.mxu0 0.0
    %77 = vmatprep.subr.mxu0 0.0
    %78 = vmatpush1.msra.mxu0 0.0
    %79 = vmatprep.subr.mxu0 0.0
    %80 = vmatpush1.msra.mxu0 0.0
    %81 = vmatprep.subr.mxu0 0.0
    %82 = vmatpush1.msra.mxu0 0.0
    %83 = vmatprep.subr.mxu0 0.0
    %84 = vmatpush1.msra.mxu0 0.0
    %85 = vmatprep.subr.mxu0 0.0
    %86 = vmatpush1.msra.mxu0 0.0
    %87 = vmatprep.subr.mxu0 0.0
    %88 = vmatpush1.msra.mxu0 0.0
    %89 = vmatprep.subr.mxu0 0.0
    %90 = vmatpush1.msra.mxu0 0.0
    %91 = vmatprep.subr.mxu0 0.0
    %92 = vmatpush1.msra.mxu0 0.0
    %93 = vmatprep.subr.mxu0 0.0
    %94 = vmatpush1.msra.mxu0 0.0
    %95 = vmatprep.subr.mxu0 0.0
    %96 = vmatpush1.msra.mxu0 0.0
    %97 = vmatprep.subr.mxu0 0.0
    %98 = vmatpush1.msra.mxu0 0.0
    %99 = vmatprep.subr.mxu0 0.0
    %100 = vmatpush1.msra.mxu0 0.0
    %101 = vmatprep.subr.mxu0 0.0
    %102 = vmatpush1.msra.mxu0 0.0
    %103 = vmatprep.subr.mxu0 0.0
    %104 = vmatpush1.msra.mxu0 0.0
    %105 = vmatprep.mubr.f32.mxu0 0.0
    %106 = vmatmul.mubr.f32.gmra.mrb[0].mxu0 %v36
    %v107 = vpop.f32.mrb[0].mxu0
    %v108 = vadd.f32 %v32, %v107
    %v109 = vpop.f32.mrb[0].mxu0
    %110 = vmatprep.mubr.f32.mxu0 0.0
    %111 = vmatmul.mubr.f32.gmra.mrb[0].mxu0 %v39
    %v112 = vpop.f32.mrb[0].mxu0
    %v113 = vadd.f32 %v32, %v112
    %v114 = vpop.f32.mrb[0].mxu0
    %115 = vdwg.mxu0
    %v116 = vmul.f32 %v108, 0.5
    %v117 = vmul.f32 %v113, 0.5
    %v118 = vmul.f32 %v108, 0.70710677
    %v119 = vmul.f32 %v113, 0.70710677
    %v120 = verf.f32.pop %v118
    %v121 = verf.f32.pop %v119
    %v122 = vadd.f32 %v120, 1.0
    %v123 = vadd.f32 %v121, 1.0
    %v124 = vmul.f32 %v116, %v122
    %v125 = vmul.f32 %v117, %v123
    %v126 = vld [vmem:[%s3] sm:$0xff]
    %v127 = vld [vmem:[%s3 + $0x8] sm:$0xff]
    %v128 = vld [vmem:[%s3 + $0x10] sm:$0xff]
    %v129 = vld [vmem:[%s3 + $0x18] sm:$0xff]
    %v130 = vld [vmem:[%s3 + $0x20] sm:$0xff]
    %v131 = vld [vmem:[%s3 + $0x28] sm:$0xff]
    %v132 = vld [vmem:[%s3 + $0x30] sm:$0xff]
    %v133 = vld [vmem:[%s3 + $0x38] sm:$0xff]
    %v134 = vld [vmem:[%s3 + $0x40] sm:$0xff]
    %v135 = vld [vmem:[%s3 + $0x48] sm:$0xff]
    %v136 = vld [vmem:[%s3 + $0x50] sm:$0xff]
    %v137 = vld [vmem:[%s3 + $0x58] sm:$0xff]
    %v138 = vld [vmem:[%s3 + $0x60] sm:$0xff]
    %v139 = vld [vmem:[%s3 + $0x68] sm:$0xff]
    %v140 = vld [vmem:[%s3 + $0x70] sm:$0xff]
    %v141 = vld [vmem:[%s3 + $0x78] sm:$0xff]
    %v142 = vld [vmem:[%s4] sm:$0x1]
    %v144 = vlaneseq
    %v145 = vshrl.u32 %v144, 7
    %v146 = vsub.s32 0, %v145
    %v147 = vrot.slane %v142, %v146
    %149 = vmatprep.subr.mxu0 0.0
    %150 = vmatpush1.msra.mxu0 %v126
    %151 = vmatprep.subr.mxu0 0.0
    %152 = vmatpush1.msra.mxu0 %v127
    %153 = vmatprep.subr.mxu0 0.0
    %154 = vmatpush1.msra.mxu0 %v128
    %155 = vmatprep.subr.mxu0 0.0
    %156 = vmatpush1.msra.mxu0 %v129
    %157 = vmatprep.subr.mxu0 0.0
    %158 = vmatpush1.msra.mxu0 %v130
    %159 = vmatprep.subr.mxu0 0.0
    %160 = vmatpush1.msra.mxu0 %v131
    %161 = vmatprep.subr.mxu0 0.0
    %162 = vmatpush1.msra.mxu0 %v132
    %163 = vmatprep.subr.mxu0 0.0
    %164 = vmatpush1.msra.mxu0 %v133
    %165 = vmatprep.subr.mxu0 0.0
    %166 = vmatpush1.msra.mxu0 %v134
    %167 = vmatprep.subr.mxu0 0.0
    %168 = vmatpush1.msra.mxu0 %v135
    %169 = vmatprep.subr.mxu0 0.0
    %170 = vmatpush1.msra.mxu0 %v136
    %171 = vmatprep.subr.mxu0 0.0
    %172 = vmatpush1.msra.mxu0 %v137
    %173 = vmatprep.subr.mxu0 0.0
    %174 = vmatpush1.msra.mxu0 %v138
    %175 = vmatprep.subr.mxu0 0.0
    %176 = vmatpush1.msra.mxu0 %v139
    %177 = vmatprep.subr.mxu0 0.0
    %178 = vmatpush1.msra.mxu0 %v140
    %179 = vmatprep.subr.mxu0 0.0
    %180 = vmatpush1.msra.mxu0 %v141
    %181 = vmatprep.subr.mxu0 0.0
    %182 = vmatpush1.msra.mxu0 0.0
    %183 = vmatprep.subr.mxu0 0.0
    %184 = vmatpush1.msra.mxu0 0.0
    %185 = vmatprep.subr.mxu0 0.0
    %186 = vmatpush1.msra.mxu0 0.0
    %187 = vmatprep.subr.mxu0 0.0
    %188 = vmatpush1.msra.mxu0 0.0
    %189 = vmatprep.subr.mxu0 0.0
    %190 = vmatpush1.msra.mxu0 0.0
    %191 = vmatprep.subr.mxu0 0.0
    %192 = vmatpush1.msra.mxu0 0.0
    %193 = vmatprep.subr.mxu0 0.0
    %194 = vmatpush1.msra.mxu0 0.0
    %195 = vmatprep.subr.mxu0 0.0
    %196 = vmatpush1.msra.mxu0 0.0
    %197 = vmatprep.subr.mxu0 0.0
    %198 = vmatpush1.msra.mxu0 0.0
    %199 = vmatprep.subr.mxu0 0.0
    %200 = vmatpush1.msra.mxu0 0.0
    %201 = vmatprep.subr.mxu0 0.0
    %202 = vmatpush1.msra.mxu0 0.0
    %203 = vmatprep.subr.mxu0 0.0
    %204 = vmatpush1.msra.mxu0 0.0
    %205 = vmatprep.subr.mxu0 0.0
    %206 = vmatpush1.msra.mxu0 0.0
    %207 = vmatprep.subr.mxu0 0.0
    %208 = vmatpush1.msra.mxu0 0.0
    %209 = vmatprep.subr.mxu0 0.0
    %210 = vmatpush1.msra.mxu0 0.0
    %211 = vmatprep.subr.mxu0 0.0
    %212 = vmatpush1.msra.mxu0 0.0
    %213 = vmatprep.mubr.f32.mxu0 0.0
    %214 = vmatmul.mubr.f32.gmra.mrb[0].mxu0 %v124
    %v215 = vpop.f32.mrb[0].mxu0
    %v216 = vadd.f32 %v147, %v215
    %v217 = vpop.f32.mrb[0].mxu0
    %218 = vmatprep.mubr.f32.mxu0 0.0
    %219 = vmatmul.mubr.f32.gmra.mrb[0].mxu0 %v125
    %v220 = vpop.f32.mrb[0].mxu0
    %v221 = vadd.f32 %v147, %v220
    %v222 = vpop.f32.mrb[0].mxu0
    %223 = vdwg.mxu0
    %224 = vst.msk [vmem:[#allocation2] sm:$0xff] %vm34, %v216
    %225 = vst.msk [vmem:[#allocation2 + $0x8] sm:$0xff] %vm34, %v221
    // Predicated region
    $region22: #{tpu_custom_call.1} parent=1 // pred_check
      _
    $region23: #{tpu_custom_call.1} parent=1 // pred_check_branch
      %227 = sbr.rel (0) target = $region25
    $region24: #{tpu_custom_call.1} parent=1 // pred_region
      %s229 = ssub.s32 256, 256
      %230 = vsyncadd [#allocation3], %s229
      %s231 = sshll.u32 [#allocation2], 4
      %s232 = int_to_ptr.vmem [resolvable:$true] %s231
      %237 = dma.vmem_to_hbm [thread:$0]  %s232, 256, %s5, [#allocation3], 128, 128, 8
    $region25: #{tpu_custom_call.1} parent=1 // pred_fallthru
      _
    // Predicated region
    $region26: #{tpu_custom_call.1} parent=1 // pred_check
      _
    $region27: #{tpu_custom_call.1} parent=1 // pred_check_branch
      %239 = sbr.rel (0) target = $region29
    $region28: #{tpu_custom_call.1} parent=1 // pred_region
      %240 = dma.done [#allocation3], 256
    $region29: #{tpu_custom_call.1} parent=1 // pred_fallthru
      _
    %241 = vsyncpa [#allocation3], 1

</llo_original>
